<compile_context>
chip_gen: v7x
topology: tpu7x:2x2x1
jax: 0.10.0
libtpu: 0.0.40
codegen_flags: <defaults>
</compile_context>

<pallas_src>
import jax
import jax.numpy as jnp
from jax.experimental import pallas as pl
from jax.experimental.pallas import tpu as pltpu


def mnist_net_kernel(x_ref, w1_ref, b1_ref, w3_ref, b3_ref,
                     w4_ref, b4_ref, w2_ref, b2_ref, o_ref):
    # x_ref: (TB, in_size) fp32; wN_ref: (K, N) bf16; bN_ref: (1, N) fp32;
    # o_ref: (TB, out_p) fp32.
    cdt = w1_ref.dtype  # compute dtype fed to the MXU (bf16)

    x = x_ref[...].astype(cdt)                                # fp32 -> bf16 in-kernel
    h = jnp.dot(x, w1_ref[...], preferred_element_type=jnp.float32) + b1_ref[...]
    h = jnp.maximum(h, 0.0)                                   # fp32 VPU ops

    h = jnp.dot(h.astype(cdt), w3_ref[...],
                preferred_element_type=jnp.float32) + b3_ref[...]
    h = jnp.maximum(h, 0.0)

    h = jnp.dot(h.astype(cdt), w4_ref[...],
                preferred_element_type=jnp.float32) + b4_ref[...]
    h = jnp.maximum(h, 0.0)

    out = jnp.dot(h.astype(cdt), w2_ref[...],
                  preferred_element_type=jnp.float32) + b2_ref[...]
    o_ref[...] = out.astype(o_ref.dtype)


def _round_up(n, m):
    return pl.cdiv(n, m) * m


def mnist_net_forward(xb, params, *, tile_b=1024, compute_dtype=jnp.bfloat16):
    """xb: (B, C, H, W) or (B, in_size). params: PyTorch-layout weights (fp32)."""
    B = xb.shape[0]
    # xb.view(xb.size(0), -1); reshape of a dense array is layout-only (no copy).
    x2d = jnp.asarray(xb, jnp.float32).reshape(B, -1)
    in_size = x2d.shape[1]
    hidden = params["w1"].shape[0]
    out_size = params["w2"].shape[0]

    # Lane-pad only the N / hidden dims (cheap, resident weights); x keeps its
    # natural in_size last dim (block last dim == full array dim is legal).
    hid_p = _round_up(hidden, 128)
    out_p = _round_up(out_size, 128)

    # Batch tiling over the UNPADDED batch: ragged last tile is handled by
    # Pallas (OOB reads are garbage in independent rows; OOB writes dropped).
    MIN_TB = 8                                       # fp32 sublane granularity
    tb = min(_round_up(B, MIN_TB), _round_up(tile_b, MIN_TB))
    # v7x has 2 TensorCores: make sure the "parallel" batch axis has >= 2 grid
    # steps whenever the batch is big enough to split.
    if pl.cdiv(B, tb) == 1 and tb >= 2 * MIN_TB:
        tb = _round_up(pl.cdiv(B, 2), MIN_TB)
    grid = (pl.cdiv(B, tb),)

    def pad2(a, rows, cols):
        return jnp.pad(a, ((0, rows - a.shape[0]), (0, cols - a.shape[1])))

    # Weights: (out, in) -> (in, out), zero-pad N (and hidden K) dims, cast bf16.
    w1 = pad2(jnp.asarray(params["w1"], jnp.float32).T, in_size, hid_p).astype(compute_dtype)
    w3 = pad2(jnp.asarray(params["w3"], jnp.float32).T, hid_p, hid_p).astype(compute_dtype)
    w4 = pad2(jnp.asarray(params["w4"], jnp.float32).T, hid_p, hid_p).astype(compute_dtype)
    w2 = pad2(jnp.asarray(params["w2"], jnp.float32).T, hid_p, out_p).astype(compute_dtype)

    # Biases stay fp32 (added after the fp32-accumulated matmul).
    def pad_bias(b, n):
        return jnp.pad(jnp.asarray(b, jnp.float32), (0, n - b.shape[0]))[None, :]

    b1 = pad_bias(params["b1"], hid_p)
    b3 = pad_bias(params["b3"], hid_p)
    b4 = pad_bias(params["b4"], hid_p)
    b2 = pad_bias(params["b2"], out_p)

    # Resident operands: constant index_map -> DMA'd once, kept in VMEM.
    def full(a):
        return pl.BlockSpec(a.shape, lambda i: (0,) * a.ndim)

    wsize = jnp.dtype(compute_dtype).itemsize
    cost = pl.CostEstimate(
        flops=2 * B * (in_size * hid_p + 2 * hid_p * hid_p + hid_p * out_p),
        transcendentals=0,
        bytes_accessed=(B * in_size * 4                                        # x fp32 read
                        + (in_size * hid_p + 2 * hid_p * hid_p + hid_p * out_p) * wsize
                        + (3 * hid_p + out_p) * 4                              # fp32 biases
                        + B * out_p * 4),                                      # fp32 output
    )

    out_pad = pl.pallas_call(
        mnist_net_kernel,
        out_shape=jax.ShapeDtypeStruct((B, out_p), jnp.float32),
        grid=grid,
        in_specs=[
            pl.BlockSpec((tb, in_size), lambda i: (i, 0)),   # x: tiled over batch only
            full(w1), full(b1),
            full(w3), full(b3),
            full(w4), full(b4),
            full(w2), full(b2),
        ],
        out_specs=pl.BlockSpec((tb, out_p), lambda i: (i, 0)),
        compiler_params=pltpu.CompilerParams(
            dimension_semantics=("parallel",),
            vmem_limit_bytes=48 * 1024 * 1024),
        cost_estimate=cost,
    )(x2d, w1, b1, w3, b3, w4, b4, w2, b2)

    # Strip only the lane-padded output columns (batch was never padded).
    return out_pad[:, :out_size]


def init_params(key, in_size, hidden_size, out_size):
    """Deterministic synthetic init, PyTorch Linear layout: W (out, in), b (out,)."""
    ks = jax.random.split(key, 8)

    def lin(kw, kb, fan_in, fan_out):
        bound = 1.0 / jnp.sqrt(fan_in)
        w = jax.random.uniform(kw, (fan_out, fan_in), jnp.float32, -bound, bound)
        b = jax.random.uniform(kb, (fan_out,), jnp.float32, -bound, bound)
        return w, b

    w1, b1 = lin(ks[0], ks[1], in_size, hidden_size)
    w3, b3 = lin(ks[2], ks[3], hidden_size, hidden_size)
    w4, b4 = lin(ks[4], ks[5], hidden_size, hidden_size)
    w2, b2 = lin(ks[6], ks[7], hidden_size, out_size)
    return dict(w1=w1, b1=b1, w3=w3, b3=b3, w4=w4, b4=b4, w2=w2, b2=b2)


def reference_forward(xb, p, compute_dtype=jnp.bfloat16):
    """JAX reference mirroring the kernel math (bf16 operands, fp32 accumulate)."""
    x = jnp.asarray(xb, jnp.float32).reshape(xb.shape[0], -1)

    def lin(h, w, b):
        return jnp.dot(h.astype(compute_dtype),
                       jnp.asarray(w, jnp.float32).T.astype(compute_dtype),
                       preferred_element_type=jnp.float32) + jnp.asarray(b, jnp.float32)

    h = jnp.maximum(lin(x, p["w1"], p["b1"]), 0.0)
    h = jnp.maximum(lin(h, p["w3"], p["b3"]), 0.0)
    h = jnp.maximum(lin(h, p["w4"], p["b4"]), 0.0)
    return lin(h, p["w2"], p["b2"])


if __name__ == "__main__":
    key = jax.random.PRNGKey(0)
    k_x, k_p, k_x2 = jax.random.split(key, 3)

    # MNIST-like small shapes: batch=8, NCHW input (8, 1, 28, 28) -> in_size=784.
    B, C, H, W = 8, 1, 28, 28
    in_size, hidden_size, out_size = C * H * W, 128, 10

    xb = jax.random.normal(k_x, (B, C, H, W), jnp.float32)
    params = init_params(k_p, in_size, hidden_size, out_size)

    # Case 1: tiny batch -> single grid step, everything resident in VMEM.
    out = jax.block_until_ready(mnist_net_forward(xb, params))
    ref = reference_forward(xb, params)
    assert out.shape == (B, out_size)
    assert jnp.allclose(out, ref, atol=2e-2, rtol=2e-2), "mismatch vs. JAX reference (B=8)"

    # Case 2: batch not divisible by tile -> multi-step grid with a ragged last
    # tile (no batch padding; OOB rows are discarded at the output boundary).
    B2 = 40
    xb2 = jax.random.normal(k_x2, (B2, in_size), jnp.float32)
    out2 = jax.block_until_ready(mnist_net_forward(xb2, params, tile_b=16))
    ref2 = reference_forward(xb2, params)
    assert out2.shape == (B2, out_size)
    assert jnp.allclose(out2, ref2, atol=2e-2, rtol=2e-2), "mismatch vs. JAX reference (B=40)"

    print("KERNEL_OK")
</pallas_src>

<mosaic_0001>
module attributes {stable_mosaic.version = 11 : i64} {
  func.func @mnist_net_kernel(%arg0: i32, %arg1: memref<8x784xf32, #tpu.memory_space<vmem>>, %arg2: memref<784x128xbf16, #tpu.memory_space<vmem>>, %arg3: memref<1x128xf32, #tpu.memory_space<vmem>>, %arg4: memref<128x128xbf16, #tpu.memory_space<vmem>>, %arg5: memref<1x128xf32, #tpu.memory_space<vmem>>, %arg6: memref<128x128xbf16, #tpu.memory_space<vmem>>, %arg7: memref<1x128xf32, #tpu.memory_space<vmem>>, %arg8: memref<128x128xbf16, #tpu.memory_space<vmem>>, %arg9: memref<1x128xf32, #tpu.memory_space<vmem>>, %arg10: memref<8x128xf32, #tpu.memory_space<vmem>>) attributes {dimension_semantics = [#tpu.dimension_semantics<parallel>], iteration_bounds = array<i64: 1>, scalar_prefetch = 0 : i64, scratch_operands = 0 : i64, tpu.core_type = #tpu.core_type<tc>, window_params = [{transform_indices = @transform_0, window_bounds = array<i64: 8, 784>}, {pipeline_mode = #tpu.pipeline_mode<synchronous>, transform_indices = @transform_1, window_bounds = array<i64: 784, 128>}, {pipeline_mode = #tpu.pipeline_mode<synchronous>, transform_indices = @transform_2, window_bounds = array<i64: 1, 128>}, {pipeline_mode = #tpu.pipeline_mode<synchronous>, transform_indices = @transform_3, window_bounds = array<i64: 128, 128>}, {pipeline_mode = #tpu.pipeline_mode<synchronous>, transform_indices = @transform_4, window_bounds = array<i64: 1, 128>}, {pipeline_mode = #tpu.pipeline_mode<synchronous>, transform_indices = @transform_5, window_bounds = array<i64: 128, 128>}, {pipeline_mode = #tpu.pipeline_mode<synchronous>, transform_indices = @transform_6, window_bounds = array<i64: 1, 128>}, {pipeline_mode = #tpu.pipeline_mode<synchronous>, transform_indices = @transform_7, window_bounds = array<i64: 128, 128>}, {pipeline_mode = #tpu.pipeline_mode<synchronous>, transform_indices = @transform_8, window_bounds = array<i64: 1, 128>}, {transform_indices = @transform_9, window_bounds = array<i64: 8, 128>}]} {
    %c0 = arith.constant 0 : index
    %c0_0 = arith.constant 0 : index
    %0 = vector.load %arg1[%c0, %c0_0] : memref<8x784xf32, #tpu.memory_space<vmem>>, vector<8x784xf32>
    %1 = arith.truncf %0 : vector<8x784xf32> to vector<8x784xbf16>
    %c0_1 = arith.constant 0 : index
    %c0_2 = arith.constant 0 : index
    %2 = vector.load %arg2[%c0_1, %c0_2] : memref<784x128xbf16, #tpu.memory_space<vmem>>, vector<784x128xbf16>
    %cst = arith.constant dense<0.000000e+00> : vector<8x128xf32>
    %3 = tpu.matmul %1, %2, %cst {dimension_numbers = #tpu.dot_dimension_numbers<[1], [0], [0], [1], [0, 0, 1, 1], [], []>} : vector<8x784xbf16>, vector<784x128xbf16>, vector<8x128xf32> -> vector<8x128xf32>
    %c0_3 = arith.constant 0 : index
    %c0_4 = arith.constant 0 : index
    %4 = vector.load %arg3[%c0_3, %c0_4] : memref<1x128xf32, #tpu.memory_space<vmem>>, vector<1x128xf32>
    %5 = vector.broadcast %4 : vector<1x128xf32> to vector<8x128xf32>
    %6 = arith.addf %3, %5 : vector<8x128xf32>
    %cst_5 = arith.constant 0.000000e+00 : f32
    %7 = vector.broadcast %cst_5 : f32 to vector<8x128xf32>
    %8 = arith.maximumf %6, %7 : vector<8x128xf32>
    %9 = arith.truncf %8 : vector<8x128xf32> to vector<8x128xbf16>
    %c0_6 = arith.constant 0 : index
    %c0_7 = arith.constant 0 : index
    %10 = vector.load %arg4[%c0_6, %c0_7] : memref<128x128xbf16, #tpu.memory_space<vmem>>, vector<128x128xbf16>
    %cst_8 = arith.constant dense<0.000000e+00> : vector<8x128xf32>
    %11 = tpu.matmul %9, %10, %cst_8 {dimension_numbers = #tpu.dot_dimension_numbers<[1], [0], [0], [1], [0, 0, 1, 1], [], []>} : vector<8x128xbf16>, vector<128x128xbf16>, vector<8x128xf32> -> vector<8x128xf32>
    %c0_9 = arith.constant 0 : index
    %c0_10 = arith.constant 0 : index
    %12 = vector.load %arg5[%c0_9, %c0_10] : memref<1x128xf32, #tpu.memory_space<vmem>>, vector<1x128xf32>
    %13 = vector.broadcast %12 : vector<1x128xf32> to vector<8x128xf32>
    %14 = arith.addf %11, %13 : vector<8x128xf32>
    %cst_11 = arith.constant 0.000000e+00 : f32
    %15 = vector.broadcast %cst_11 : f32 to vector<8x128xf32>
    %16 = arith.maximumf %14, %15 : vector<8x128xf32>
    %17 = arith.truncf %16 : vector<8x128xf32> to vector<8x128xbf16>
    %c0_12 = arith.constant 0 : index
    %c0_13 = arith.constant 0 : index
    %18 = vector.load %arg6[%c0_12, %c0_13] : memref<128x128xbf16, #tpu.memory_space<vmem>>, vector<128x128xbf16>
    %cst_14 = arith.constant dense<0.000000e+00> : vector<8x128xf32>
    %19 = tpu.matmul %17, %18, %cst_14 {dimension_numbers = #tpu.dot_dimension_numbers<[1], [0], [0], [1], [0, 0, 1, 1], [], []>} : vector<8x128xbf16>, vector<128x128xbf16>, vector<8x128xf32> -> vector<8x128xf32>
    %c0_15 = arith.constant 0 : index
    %c0_16 = arith.constant 0 : index
    %20 = vector.load %arg7[%c0_15, %c0_16] : memref<1x128xf32, #tpu.memory_space<vmem>>, vector<1x128xf32>
    %21 = vector.broadcast %20 : vector<1x128xf32> to vector<8x128xf32>
    %22 = arith.addf %19, %21 : vector<8x128xf32>
    %cst_17 = arith.constant 0.000000e+00 : f32
    %23 = vector.broadcast %cst_17 : f32 to vector<8x128xf32>
    %24 = arith.maximumf %22, %23 : vector<8x128xf32>
    %25 = arith.truncf %24 : vector<8x128xf32> to vector<8x128xbf16>
    %c0_18 = arith.constant 0 : index
    %c0_19 = arith.constant 0 : index
    %26 = vector.load %arg8[%c0_18, %c0_19] : memref<128x128xbf16, #tpu.memory_space<vmem>>, vector<128x128xbf16>
    %cst_20 = arith.constant dense<0.000000e+00> : vector<8x128xf32>
    %27 = tpu.matmul %25, %26, %cst_20 {dimension_numbers = #tpu.dot_dimension_numbers<[1], [0], [0], [1], [0, 0, 1, 1], [], []>} : vector<8x128xbf16>, vector<128x128xbf16>, vector<8x128xf32> -> vector<8x128xf32>
    %c0_21 = arith.constant 0 : index
    %c0_22 = arith.constant 0 : index
    %28 = vector.load %arg9[%c0_21, %c0_22] : memref<1x128xf32, #tpu.memory_space<vmem>>, vector<1x128xf32>
    %29 = vector.broadcast %28 : vector<1x128xf32> to vector<8x128xf32>
    %30 = arith.addf %27, %29 : vector<8x128xf32>
    %c0_23 = arith.constant 0 : index
    %c0_24 = arith.constant 0 : index
    %31 = vector.load %arg10[%c0_23, %c0_24] : memref<8x128xf32, #tpu.memory_space<vmem>>, vector<8x128xf32>
    tpu.vector_store %arg10[%c0_23, %c0_24], %30 {strides = array<i32>} : memref<8x128xf32, #tpu.memory_space<vmem>>, vector<8x128xf32>,
    return
  }
  func.func @transform_0(%arg0: i32) -> (i32, i32) {
    %c0_i32 = arith.constant 0 : i32
    %c0_i32_0 = arith.constant 0 : i32
    return %arg0, %c0_i32 : i32, i32
  }
  func.func @transform_1(%arg0: i32) -> (i32, i32) {
    %c0_i32 = arith.constant 0 : i32
    %c0_i32_0 = arith.constant 0 : i32
    %c0_i32_1 = arith.constant 0 : i32
    return %c0_i32, %c0_i32_0 : i32, i32
  }
  func.func @transform_2(%arg0: i32) -> (i32, i32) {
    %c0_i32 = arith.constant 0 : i32
    %c0_i32_0 = arith.constant 0 : i32
    %c0_i32_1 = arith.constant 0 : i32
    return %c0_i32, %c0_i32_0 : i32, i32
  }
  func.func @transform_3(%arg0: i32) -> (i32, i32) {
    %c0_i32 = arith.constant 0 : i32
    %c0_i32_0 = arith.constant 0 : i32
    %c0_i32_1 = arith.constant 0 : i32
    return %c0_i32, %c0_i32_0 : i32, i32
  }
  func.func @transform_4(%arg0: i32) -> (i32, i32) {
    %c0_i32 = arith.constant 0 : i32
    %c0_i32_0 = arith.constant 0 : i32
    %c0_i32_1 = arith.constant 0 : i32
    return %c0_i32, %c0_i32_0 : i32, i32
  }
  func.func @transform_5(%arg0: i32) -> (i32, i32) {
    %c0_i32 = arith.constant 0 : i32
    %c0_i32_0 = arith.constant 0 : i32
    %c0_i32_1 = arith.constant 0 : i32
    return %c0_i32, %c0_i32_0 : i32, i32
  }
  func.func @transform_6(%arg0: i32) -> (i32, i32) {
    %c0_i32 = arith.constant 0 : i32
    %c0_i32_0 = arith.constant 0 : i32
    %c0_i32_1 = arith.constant 0 : i32
    return %c0_i32, %c0_i32_0 : i32, i32
  }
  func.func @transform_7(%arg0: i32) -> (i32, i32) {
    %c0_i32 = arith.constant 0 : i32
    %c0_i32_0 = arith.constant 0 : i32
    %c0_i32_1 = arith.constant 0 : i32
    return %c0_i32, %c0_i32_0 : i32, i32
  }
  func.func @transform_8(%arg0: i32) -> (i32, i32) {
    %c0_i32 = arith.constant 0 : i32
    %c0_i32_0 = arith.constant 0 : i32
    %c0_i32_1 = arith.constant 0 : i32
    return %c0_i32, %c0_i32_0 : i32, i32
  }
  func.func @transform_9(%arg0: i32) -> (i32, i32) {
    %c0_i32 = arith.constant 0 : i32
    %c0_i32_0 = arith.constant 0 : i32
    return %arg0, %c0_i32 : i32, i32
  }
}

</mosaic_0001>

<llo_original>
// kernel: tpu_custom_call.1
$region0: #{tpu_custom_call.1}
  #allocation0 [shape = 'u32[]', space=smem, size = 0x4, offset = 0x4, fixed_abs, tag = 'smem constant byte address 0x4 - core index']
  #allocation1 [shape = 'u32[144,128]{1,0:T(1,128)}', space=vmem, size = 0x12000, scoped, tag = 'internal scratch']
  %s0 = inlined_call_operand.hbm [shape: f32[8,784], index: 0, kind: input, shape index: {}]
  %s1 = inlined_call_operand.hbm [shape: bf16[784,128], index: 1, kind: input, shape index: {}]
  %s2 = inlined_call_operand.vmem [shape: f32[1,128], index: 2, kind: input, shape index: {}]
  %s3 = inlined_call_operand.hbm [shape: bf16[128,128], index: 3, kind: input, shape index: {}]
  %s4 = inlined_call_operand.vmem [shape: f32[1,128], index: 4, kind: input, shape index: {}]
  %s5 = inlined_call_operand.hbm [shape: bf16[128,128], index: 5, kind: input, shape index: {}]
  %s6 = inlined_call_operand.vmem [shape: f32[1,128], index: 6, kind: input, shape index: {}]
  %s7 = inlined_call_operand.hbm [shape: bf16[128,128], index: 7, kind: input, shape index: {}]
  %s8 = inlined_call_operand.vmem [shape: f32[1,128], index: 8, kind: input, shape index: {}]
  %s9 = inlined_call_operand.hbm [shape: f32[8,128], index: 9, kind: output, shape index: {}]
  %s10 = sld [smem:[#allocation0]]
  $region66: #{tpu_custom_call.1} parent=0
    _
  %s12 = ssub.s32 1, %s10
  %s13 = scalar_select 0, %s12, %s10
  $region1: #{tpu_custom_call.1} parent=0
    #allocation2 [shape = 'u8[28672]{0}', space=vmem, size = 0x7000, scoped, tag = 'input window, operand 0, single buffered']
    #allocation3 [shape = 's32[1]{0}', space=sflag, size = 0x4, scoped, tag = 'scoped memory for tpu_custom_call.1']
    #allocation4 [shape = 's32[1]{0}', space=sflag, size = 0x4, scoped, tag = 'scoped memory for tpu_custom_call.1']
    #allocation5 [shape = 'u8[200704]{0}', space=vmem, size = 0x31000, scoped, tag = 'input window, operand 1, single buffered']
    #allocation6 [shape = 's32[1]{0}', space=sflag, size = 0x4, scoped, tag = 'scoped memory for tpu_custom_call.1']
    #allocation7 [shape = 'u8[32768]{0}', space=vmem, size = 0x8000, scoped, tag = 'input window, operand 3, single buffered']
    #allocation8 [shape = 'u8[32768]{0}', space=vmem, size = 0x8000, scoped, tag = 'input window, operand 5, single buffered']
    #allocation9 [shape = 's32[1]{0}', space=sflag, size = 0x4, scoped, tag = 'scoped memory for tpu_custom_call.1']
    #allocation10 [shape = 'u8[32768]{0}', space=vmem, size = 0x8000, scoped, tag = 'input window, operand 7, single buffered']
    #allocation11 [shape = 'u8[4096]{0}', space=vmem, size = 0x1000, scoped, tag = 'output window, operand 0, single buffered']
    %14 = vsyncpa [#allocation3], 0
    %15 = vsyncpa [#allocation6], 0
    %16 = vsyncpa [#allocation9], 0
    %17 = vsyncpa [#allocation4], 0
    // Predicated region
    $region2: #{tpu_custom_call.1} parent=1 // pred_check
      _
    $region3: #{tpu_custom_call.1} parent=1 // pred_check_branch
      %19 = sbr.rel (0) target = $region5
    $region4: #{tpu_custom_call.1} parent=1 // pred_region
      %s21 = ssub.s32 896, 896
      %22 = vsyncadd [#allocation3], %s21
      %s24 = sshll.u32 [#allocation2], 4
      %s25 = int_to_ptr.vmem [resolvable:$true] %s24
      %27 = dma.hbm_to_vmem [thread:$0]  %s0, 896, %s25, [#allocation3]
    $region5: #{tpu_custom_call.1} parent=1 // pred_fallthru
      _
    // Predicated region
    $region6: #{tpu_custom_call.1} parent=1 // pred_check
      _
    $region7: #{tpu_custom_call.1} parent=1 // pred_check_branch
      %29 = sbr.rel (0) target = $region9
    $region8: #{tpu_custom_call.1} parent=1 // pred_region
      %s31 = ssub.s32 6272, 6272
      %32 = vsyncadd [#allocation6], %s31
      %s33 = sshll.u32 [#allocation5], 4
      %s34 = int_to_ptr.vmem [resolvable:$true] %s33
      %39 = dma.hbm_to_vmem [thread:$0]  %s1, 6272, %s34, [#allocation6], 64, 64, 4
    $region9: #{tpu_custom_call.1} parent=1 // pred_fallthru
      _
    // Predicated region
    $region10: #{tpu_custom_call.1} parent=1 // pred_check
      _
    $region11: #{tpu_custom_call.1} parent=1 // pred_check_branch
      %41 = sbr.rel (0) target = $region13
    $region12: #{tpu_custom_call.1} parent=1 // pred_region
      _
    $region13: #{tpu_custom_call.1} parent=1 // pred_fallthru
      _
    // Predicated region
    $region14: #{tpu_custom_call.1} parent=1 // pred_check
      _
    $region15: #{tpu_custom_call.1} parent=1 // pred_check_branch
      %43 = sbr.rel (0) target = $region17
    $region16: #{tpu_custom_call.1} parent=1 // pred_region
      %s45 = ssub.s32 1024, 1024
      %46 = vsyncadd [#allocation6], %s45
      %s47 = sshll.u32 [#allocation7], 4
      %s48 = int_to_ptr.vmem [resolvable:$true] %s47
      %53 = dma.hbm_to_vmem [thread:$0]  %s3, 1024, %s48, [#allocation6], 64, 64, 4
    $region17: #{tpu_custom_call.1} parent=1 // pred_fallthru
      _
    // Predicated region
    $region18: #{tpu_custom_call.1} parent=1 // pred_check
      _
    $region19: #{tpu_custom_call.1} parent=1 // pred_check_branch
      %55 = sbr.rel (0) target = $region21
    $region20: #{tpu_custom_call.1} parent=1 // pred_region
      _
    $region21: #{tpu_custom_call.1} parent=1 // pred_fallthru
      _
    // Predicated region
    $region22: #{tpu_custom_call.1} parent=1 // pred_check
      _
    $region23: #{tpu_custom_call.1} parent=1 // pred_check_branch
      %57 = sbr.rel (0) target = $region25
    $region24: #{tpu_custom_call.1} parent=1 // pred_region
      %s59 = ssub.s32 1024, 1024
      %60 = vsyncadd [#allocation9], %s59
      %s61 = sshll.u32 [#allocation8], 4
      %s62 = int_to_ptr.vmem [resolvable:$true] %s61
      %67 = dma.hbm_to_vmem [thread:$0]  %s5, 1024, %s62, [#allocation9], 64, 64, 4
    $region25: #{tpu_custom_call.1} parent=1 // pred_fallthru
      _
    // Predicated region
    $region26: #{tpu_custom_call.1} parent=1 // pred_check
      _
    $region27: #{tpu_custom_call.1} parent=1 // pred_check_branch
      %69 = sbr.rel (0) target = $region29
    $region28: #{tpu_custom_call.1} parent=1 // pred_region
      _
    $region29: #{tpu_custom_call.1} parent=1 // pred_fallthru
      _
    // Predicated region
    $region30: #{tpu_custom_call.1} parent=1 // pred_check
      _
    $region31: #{tpu_custom_call.1} parent=1 // pred_check_branch
      %71 = sbr.rel (0) target = $region33
    $region32: #{tpu_custom_call.1} parent=1 // pred_region
      %s73 = ssub.s32 1024, 1024
      %74 = vsyncadd [#allocation9], %s73
      %s75 = sshll.u32 [#allocation10], 4
      %s76 = int_to_ptr.vmem [resolvable:$true] %s75
      %81 = dma.hbm_to_vmem [thread:$0]  %s7, 1024, %s76, [#allocation9], 64, 64, 4
    $region33: #{tpu_custom_call.1} parent=1 // pred_fallthru
      _
    // Predicated region
    $region34: #{tpu_custom_call.1} parent=1 // pred_check
      _
    $region35: #{tpu_custom_call.1} parent=1 // pred_check_branch
      %83 = sbr.rel (0) target = $region37
    $region36: #{tpu_custom_call.1} parent=1 // pred_region
      _
    $region37: #{tpu_custom_call.1} parent=1 // pred_fallthru
      _
    // Predicated region
    $region38: #{tpu_custom_call.1} parent=1 // pred_check
      _
    $region39: #{tpu_custom_call.1} parent=1 // pred_check_branch
      %85 = sbr.rel (0) target = $region41
    $region40: #{tpu_custom_call.1} parent=1 // pred_region
      %86 = dma.done [#allocation3], 896
    $region41: #{tpu_custom_call.1} parent=1 // pred_fallthru
      _
    // Predicated region
    $region42: #{tpu_custom_call.1} parent=1 // pred_check
      _
    $region43: #{tpu_custom_call.1} parent=1 // pred_check_branch
      %88 = sbr.rel (0) target = $region45
    $region44: #{tpu_custom_call.1} parent=1 // pred_region
      %89 = dma.done [#allocation6], 6272
    $region45: #{tpu_custom_call.1} parent=1 // pred_fallthru
      _
    // Predicated region
    $region46: #{tpu_custom_call.1} parent=1 // pred_check
      _
    $region47: #{tpu_custom_call.1} parent=1 // pred_check_branch
      %91 = sbr.rel (0) target = $region49
    $region48: #{tpu_custom_call.1} parent=1 // pred_region
      %92 = dma.done [#allocation6], 1024
    $region49: #{tpu_custom_call.1} parent=1 // pred_fallthru
      _
    // Predicated region
    $region50: #{tpu_custom_call.1} parent=1 // pred_check
      _
    $region51: #{tpu_custom_call.1} parent=1 // pred_check_branch
      %94 = sbr.rel (0) target = $region53
    $region52: #{tpu_custom_call.1} parent=1 // pred_region
      %95 = dma.done [#allocation9], 1024
    $region53: #{tpu_custom_call.1} parent=1 // pred_fallthru
      _
    // Predicated region
    $region54: #{tpu_custom_call.1} parent=1 // pred_check
      _
    $region55: #{tpu_custom_call.1} parent=1 // pred_check_branch
      %97 = sbr.rel (0) target = $region57
    $region56: #{tpu_custom_call.1} parent=1 // pred_region
      %98 = dma.done [#allocation9], 1024
    $region57: #{tpu_custom_call.1} parent=1 // pred_fallthru
      _
    %v100 = vld [vmem:[#allocation2] sm:$0xff]
    %v101 = vld [vmem:[#allocation2 + $0x8] sm:$0xff]
    %v102 = vld [vmem:[#allocation2 + $0x10] sm:$0xff]
    %v103 = vld [vmem:[#allocation2 + $0x18] sm:$0xff]
    %v104 = vld [vmem:[#allocation2 + $0x20] sm:$0xff]
    %v105 = vld [vmem:[#allocation2 + $0x28] sm:$0xff]
    %v106 = vld [vmem:[#allocation2 + $0x30] sm:$0xff]
    %v107 = vpack.c.bf16 %v100, %v100
    %v108 = vpack.c.bf16 %v101, %v101
    %v109 = vpack.c.bf16 %v102, %v102
    %v110 = vpack.c.bf16 %v103, %v103
    %v111 = vpack.c.bf16 %v104, %v104
    %v112 = vpack.c.bf16 %v105, %v105
    %v113 = vpack.c.bf16 %v106, %v106
    %v114 = vld [vmem:[#allocation5] sm:$0xf]
    %v115 = vld [vmem:[#allocation5 + $0x4] sm:$0xf]
    %v116 = vld [vmem:[#allocation5 + $0x8] sm:$0xf]
    %v117 = vld [vmem:[#allocation5 + $0xc] sm:$0xf]
    %v118 = vld [vmem:[#allocation5 + $0x10] sm:$0xf]
    %v119 = vld [vmem:[#allocation5 + $0x14] sm:$0xf]
    %v120 = vld [vmem:[#allocation5 + $0x18] sm:$0xf]
    %v121 = vld [vmem:[#allocation5 + $0x1c] sm:$0xf]
    %v122 = vld [vmem:[#allocation5 + $0x20] sm:$0xf]
    %v123 = vld [vmem:[#allocation5 + $0x24] sm:$0xf]
    %v124 = vld [vmem:[#allocation5 + $0x28] sm:$0xf]
    %v125 = vld [vmem:[#allocation5 + $0x2c] sm:$0xf]
    %v126 = vld [vmem:[#allocation5 + $0x30] sm:$0xf]
    %v127 = vld [vmem:[#allocation5 + $0x34] sm:$0xf]
    %v128 = vld [vmem:[#allocation5 + $0x38] sm:$0xf]
    %v129 = vld [vmem:[#allocation5 + $0x3c] sm:$0xf]
    %v130 = vld [vmem:[#allocation5 + $0x40] sm:$0xf]
    %v131 = vld [vmem:[#allocation5 + $0x44] sm:$0xf]
    %v132 = vld [vmem:[#allocation5 + $0x48] sm:$0xf]
    %v133 = vld [vmem:[#allocation5 + $0x4c] sm:$0xf]
    %v134 = vld [vmem:[#allocation5 + $0x50] sm:$0xf]
    %v135 = vld [vmem:[#allocation5 + $0x54] sm:$0xf]
    %v136 = vld [vmem:[#allocation5 + $0x58] sm:$0xf]
    %v137 = vld [vmem:[#allocation5 + $0x5c] sm:$0xf]
    %v138 = vld [vmem:[#allocation5 + $0x60] sm:$0xf]
    %v139 = vld [vmem:[#allocation5 + $0x64] sm:$0xf]
    %v140 = vld [vmem:[#allocation5 + $0x68] sm:$0xf]
    %v141 = vld [vmem:[#allocation5 + $0x6c] sm:$0xf]
    %v142 = vld [vmem:[#allocation5 + $0x70] sm:$0xf]
    %v143 = vld [vmem:[#allocation5 + $0x74] sm:$0xf]
    %v144 = vld [vmem:[#allocation5 + $0x78] sm:$0xf]
    %v145 = vld [vmem:[#allocation5 + $0x7c] sm:$0xf]
    %v146 = vld [vmem:[#allocation5 + $0x80] sm:$0xf]
    %v147 = vld [vmem:[#allocation5 + $0x84] sm:$0xf]
    %v148 = vld [vmem:[#allocation5 + $0x88] sm:$0xf]
    %v149 = vld [vmem:[#allocation5 + $0x8c] sm:$0xf]
    %v150 = vld [vmem:[#allocation5 + $0x90] sm:$0xf]
    %v151 = vld [vmem:[#allocation5 + $0x94] sm:$0xf]
    %v152 = vld [vmem:[#allocation5 + $0x98] sm:$0xf]
    %v153 = vld [vmem:[#allocation5 + $0x9c] sm:$0xf]
    %v154 = vld [vmem:[#allocation5 + $0xa0] sm:$0xf]
    %v155 = vld [vmem:[#allocation5 + $0xa4] sm:$0xf]
    %v156 = vld [vmem:[#allocation5 + $0xa8] sm:$0xf]
    %v157 = vld [vmem:[#allocation5 + $0xac] sm:$0xf]
    %v158 = vld [vmem:[#allocation5 + $0xb0] sm:$0xf]
    %v159 = vld [vmem:[#allocation5 + $0xb4] sm:$0xf]
    %v160 = vld [vmem:[#allocation5 + $0xb8] sm:$0xf]
    %v161 = vld [vmem:[#allocation5 + $0xbc] sm:$0xf]
    %v162 = vld [vmem:[#allocation5 + $0xc0] sm:$0xf]
    %v163 = vld [vmem:[#allocation5 + $0xc4] sm:$0xf]
    %v164 = vld [vmem:[#allocation5 + $0xc8] sm:$0xf]
    %v165 = vld [vmem:[#allocation5 + $0xcc] sm:$0xf]
    %v166 = vld [vmem:[#allocation5 + $0xd0] sm:$0xf]
    %v167 = vld [vmem:[#allocation5 + $0xd4] sm:$0xf]
    %v168 = vld [vmem:[#allocation5 + $0xd8] sm:$0xf]
    %v169 = vld [vmem:[#allocation5 + $0xdc] sm:$0xf]
    %v170 = vld [vmem:[#allocation5 + $0xe0] sm:$0xf]
    %v171 = vld [vmem:[#allocation5 + $0xe4] sm:$0xf]
    %v172 = vld [vmem:[#allocation5 + $0xe8] sm:$0xf]
    %v173 = vld [vmem:[#allocation5 + $0xec] sm:$0xf]
    %v174 = vld [vmem:[#allocation5 + $0xf0] sm:$0xf]
    %v175 = vld [vmem:[#allocation5 + $0xf4] sm:$0xf]
    %v176 = vld [vmem:[#allocation5 + $0xf8] sm:$0xf]
    %v177 = vld [vmem:[#allocation5 + $0xfc] sm:$0xf]
    %v178 = vld [vmem:[#allocation5 + $0x100] sm:$0xf]
    %v179 = vld [vmem:[#allocation5 + $0x104] sm:$0xf]
    %v180 = vld [vmem:[#allocation5 + $0x108] sm:$0xf]
    %v181 = vld [vmem:[#allocation5 + $0x10c] sm:$0xf]
    %v182 = vld [vmem:[#allocation5 + $0x110] sm:$0xf]
    %v183 = vld [vmem:[#allocation5 + $0x114] sm:$0xf]
    %v184 = vld [vmem:[#allocation5 + $0x118] sm:$0xf]
    %v185 = vld [vmem:[#allocation5 + $0x11c] sm:$0xf]
    %v186 = vld [vmem:[#allocation5 + $0x120] sm:$0xf]
    %v187 = vld [vmem:[#allocation5 + $0x124] sm:$0xf]
    %v188 = vld [vmem:[#allocation5 + $0x128] sm:$0xf]
    %v189 = vld [vmem:[#allocation5 + $0x12c] sm:$0xf]
    %v190 = vld [vmem:[#allocation5 + $0x130] sm:$0xf]
    %v191 = vld [vmem:[#allocation5 + $0x134] sm:$0xf]
    %v192 = vld [vmem:[#allocation5 + $0x138] sm:$0xf]
    %v193 = vld [vmem:[#allocation5 + $0x13c] sm:$0xf]
    %v194 = vld [vmem:[#allocation5 + $0x140] sm:$0xf]
    %v195 = vld [vmem:[#allocation5 + $0x144] sm:$0xf]
    %v196 = vld [vmem:[#allocation5 + $0x148] sm:$0xf]
    %v197 = vld [vmem:[#allocation5 + $0x14c] sm:$0xf]
    %v198 = vld [vmem:[#allocation5 + $0x150] sm:$0xf]
    %v199 = vld [vmem:[#allocation5 + $0x154] sm:$0xf]
    %v200 = vld [vmem:[#allocation5 + $0x158] sm:$0xf]
    %v201 = vld [vmem:[#allocation5 + $0x15c] sm:$0xf]
    %v202 = vld [vmem:[#allocation5 + $0x160] sm:$0xf]
    %v203 = vld [vmem:[#allocation5 + $0x164] sm:$0xf]
    %v204 = vld [vmem:[#allocation5 + $0x168] sm:$0xf]
    %v205 = vld [vmem:[#allocation5 + $0x16c] sm:$0xf]
    %v206 = vld [vmem:[#allocation5 + $0x170] sm:$0xf]
    %v207 = vld [vmem:[#allocation5 + $0x174] sm:$0xf]
    %v208 = vld [vmem:[#allocation5 + $0x178] sm:$0xf]
    %v209 = vld [vmem:[#allocation5 + $0x17c] sm:$0xf]
    %v210 = vld [vmem:[#allocation5 + $0x180] sm:$0xf]
    %v211 = vld [vmem:[#allocation5 + $0x184] sm:$0xf]
    %v212 = vld [vmem:[%s2] sm:$0x1]
    %v214 = vlaneseq
    %v215 = vshrl.u32 %v214, 7
    %v216 = vsub.s32 0, %v215
    %v217 = vrot.slane %v212, %v216
    %v317 = vunpack.c.l.b16 %v114
    %v318 = vunpack.c.l.b16 %v115
    %v319 = vunpack.c.l.b16 %v116
    %v320 = vunpack.c.l.b16 %v117
    %v321 = vunpack.c.l.b16 %v118
    %v322 = vunpack.c.l.b16 %v119
    %v323 = vunpack.c.l.b16 %v120
    %v324 = vunpack.c.l.b16 %v121
    %v325 = vunpack.c.l.b16 %v122
    %v326 = vunpack.c.l.b16 %v123
    %v327 = vunpack.c.l.b16 %v124
    %v328 = vunpack.c.l.b16 %v125
    %v329 = vunpack.c.l.b16 %v126
    %v330 = vunpack.c.l.b16 %v127
    %v331 = vunpack.c.l.b16 %v128
    %v332 = vunpack.c.l.b16 %v129
    %v333 = vunpack.c.l.b16 %v130
    %v334 = vunpack.c.l.b16 %v131
    %v335 = vunpack.c.l.b16 %v132
    %v336 = vunpack.c.l.b16 %v133
    %v337 = vunpack.c.l.b16 %v134
    %v338 = vunpack.c.l.b16 %v135
    %v339 = vunpack.c.l.b16 %v136
    %v340 = vunpack.c.l.b16 %v137
    %v341 = vunpack.c.l.b16 %v138
    %v342 = vunpack.c.l.b16 %v139
    %v343 = vunpack.c.l.b16 %v140
    %v344 = vunpack.c.l.b16 %v141
    %v345 = vunpack.c.l.b16 %v142
    %v346 = vunpack.c.l.b16 %v143
    %v347 = vunpack.c.l.b16 %v144
    %v348 = vunpack.c.l.b16 %v145
    %v349 = vunpack.c.l.b16 %v146
    %v350 = vunpack.c.l.b16 %v147
    %v351 = vunpack.c.l.b16 %v148
    %v352 = vunpack.c.l.b16 %v149
    %v353 = vunpack.c.l.b16 %v150
    %v354 = vunpack.c.l.b16 %v151
    %v355 = vunpack.c.l.b16 %v152
    %v356 = vunpack.c.l.b16 %v153
    %v357 = vunpack.c.l.b16 %v154
    %v358 = vunpack.c.l.b16 %v155
    %v359 = vunpack.c.l.b16 %v156
    %v360 = vunpack.c.l.b16 %v157
    %v361 = vunpack.c.l.b16 %v158
    %v362 = vunpack.c.l.b16 %v159
    %v363 = vunpack.c.l.b16 %v160
    %v364 = vunpack.c.l.b16 %v161
    %v365 = vunpack.c.l.b16 %v162
    %v366 = vunpack.c.l.b16 %v163
    %v367 = vunpack.c.l.b16 %v164
    %v368 = vunpack.c.l.b16 %v165
    %v369 = vunpack.c.l.b16 %v166
    %v370 = vunpack.c.l.b16 %v167
    %v371 = vunpack.c.l.b16 %v168
    %v372 = vunpack.c.l.b16 %v169
    %v373 = vunpack.c.l.b16 %v170
    %v374 = vunpack.c.l.b16 %v171
    %v375 = vunpack.c.l.b16 %v172
    %v376 = vunpack.c.l.b16 %v173
    %v377 = vunpack.c.l.b16 %v174
    %v378 = vunpack.c.l.b16 %v175
    %v379 = vunpack.c.l.b16 %v176
    %v380 = vunpack.c.l.b16 %v177
    %v381 = vunpack.c.l.b16 %v178
    %v382 = vunpack.c.l.b16 %v179
    %v383 = vunpack.c.l.b16 %v180
    %v384 = vunpack.c.l.b16 %v181
    %v385 = vunpack.c.l.b16 %v182
    %v386 = vunpack.c.l.b16 %v183
    %v387 = vunpack.c.l.b16 %v184
    %v388 = vunpack.c.l.b16 %v185
    %v389 = vunpack.c.l.b16 %v186
    %v390 = vunpack.c.l.b16 %v187
    %v391 = vunpack.c.l.b16 %v188
    %v392 = vunpack.c.l.b16 %v189
    %v393 = vunpack.c.l.b16 %v190
    %v394 = vunpack.c.l.b16 %v191
    %v395 = vunpack.c.l.b16 %v192
    %v396 = vunpack.c.l.b16 %v193
    %v397 = vunpack.c.l.b16 %v194
    %v398 = vunpack.c.l.b16 %v195
    %v399 = vunpack.c.l.b16 %v196
    %v400 = vunpack.c.l.b16 %v197
    %v401 = vunpack.c.l.b16 %v198
    %v402 = vunpack.c.l.b16 %v199
    %v403 = vunpack.c.l.b16 %v200
    %v404 = vunpack.c.l.b16 %v201
    %v405 = vunpack.c.l.b16 %v202
    %v406 = vunpack.c.l.b16 %v203
    %v407 = vunpack.c.l.b16 %v204
    %v408 = vunpack.c.l.b16 %v205
    %v409 = vunpack.c.l.b16 %v206
    %v410 = vunpack.c.l.b16 %v207
    %v411 = vunpack.c.l.b16 %v208
    %v412 = vunpack.c.l.b16 %v209
    %v413 = vunpack.c.l.b16 %v210
    %v414 = vunpack.c.l.b16 %v211
    %v415 = vpack.c.b16 %v318, %v317
    %v416 = vpack.c.b16 %v320, %v319
    %v417 = vpack.c.b16 %v322, %v321
    %v418 = vpack.c.b16 %v324, %v323
    %v419 = vpack.c.b16 %v326, %v325
    %v420 = vpack.c.b16 %v328, %v327
    %v421 = vpack.c.b16 %v330, %v329
    %v422 = vpack.c.b16 %v332, %v331
    %v423 = vpack.c.b16 %v334, %v333
    %v424 = vpack.c.b16 %v336, %v335
    %v425 = vpack.c.b16 %v338, %v337
    %v426 = vpack.c.b16 %v340, %v339
    %v427 = vpack.c.b16 %v342, %v341
    %v428 = vpack.c.b16 %v344, %v343
    %v429 = vpack.c.b16 %v346, %v345
    %v430 = vpack.c.b16 %v348, %v347
    %v431 = vpack.c.b16 %v350, %v349
    %v432 = vpack.c.b16 %v352, %v351
    %v433 = vpack.c.b16 %v354, %v353
    %v434 = vpack.c.b16 %v356, %v355
    %v435 = vpack.c.b16 %v358, %v357
    %v436 = vpack.c.b16 %v360, %v359
    %v437 = vpack.c.b16 %v362, %v361
    %v438 = vpack.c.b16 %v364, %v363
    %v439 = vpack.c.b16 %v366, %v365
    %v440 = vpack.c.b16 %v368, %v367
    %v441 = vpack.c.b16 %v370, %v369
    %v442 = vpack.c.b16 %v372, %v371
    %v443 = vpack.c.b16 %v374, %v373
    %v444 = vpack.c.b16 %v376, %v375
    %v445 = vpack.c.b16 %v378, %v377
    %v446 = vpack.c.b16 %v380, %v379
    %v447 = vpack.c.b16 %v382, %v381
    %v448 = vpack.c.b16 %v384, %v383
    %v449 = vpack.c.b16 %v386, %v385
    %v450 = vpack.c.b16 %v388, %v387
    %v451 = vpack.c.b16 %v390, %v389
    %v452 = vpack.c.b16 %v392, %v391
    %v453 = vpack.c.b16 %v394, %v393
    %v454 = vpack.c.b16 %v396, %v395
    %v455 = vpack.c.b16 %v398, %v397
    %v456 = vpack.c.b16 %v400, %v399
    %v457 = vpack.c.b16 %v402, %v401
    %v458 = vpack.c.b16 %v404, %v403
    %v459 = vpack.c.b16 %v406, %v405
    %v460 = vpack.c.b16 %v408, %v407
    %v461 = vpack.c.b16 %v410, %v409
    %v462 = vpack.c.b16 %v412, %v411
    %v463 = vpack.c.b16 %v414, %v413
    %vm513 = vcmask 130048
    %v515 = vsel %vm513, %v113, 0
    %517 = vmatprep.subr.bf16.mxu0 0
    %518 = vmatpush1.bf16.msra.mxu0 %v415
    %519 = vmatprep.subr.bf16.mxu0 0
    %520 = vmatpush1.bf16.msra.mxu0 %v416
    %521 = vmatprep.subr.bf16.mxu0 0
    %522 = vmatpush1.bf16.msra.mxu0 %v417
    %523 = vmatprep.subr.bf16.mxu0 0
    %524 = vmatpush1.bf16.msra.mxu0 %v418
    %525 = vmatprep.subr.bf16.mxu0 0
    %526 = vmatpush1.bf16.msra.mxu0 %v419
    %527 = vmatprep.subr.bf16.mxu0 0
    %528 = vmatpush1.bf16.msra.mxu0 %v420
    %529 = vmatprep.subr.bf16.mxu0 0
    %530 = vmatpush1.bf16.msra.mxu0 %v421
    %531 = vmatprep.subr.bf16.mxu0 0
    %532 = vmatpush1.bf16.msra.mxu0 %v422
    %533 = vmatprep.subr.bf16.mxu0 0
    %534 = vmatpush1.bf16.msra.mxu0 %v423
    %535 = vmatprep.subr.bf16.mxu0 0
    %536 = vmatpush1.bf16.msra.mxu0 %v424
    %537 = vmatprep.subr.bf16.mxu0 0
    %538 = vmatpush1.bf16.msra.mxu0 %v425
    %539 = vmatprep.subr.bf16.mxu0 0
    %540 = vmatpush1.bf16.msra.mxu0 %v426
    %541 = vmatprep.subr.bf16.mxu0 0
    %542 = vmatpush1.bf16.msra.mxu0 %v427
    %543 = vmatprep.subr.bf16.mxu0 0
    %544 = vmatpush1.bf16.msra.mxu0 %v428
    %545 = vmatprep.subr.bf16.mxu0 0
    %546 = vmatpush1.bf16.msra.mxu0 %v429
    %547 = vmatprep.subr.bf16.mxu0 0
    %548 = vmatpush1.bf16.msra.mxu0 %v430
    %549 = vmatprep.mubr.bf16.mxu0 %v108
    %550 = vmatmul.mubr.bf16.gmra.mrb[0].mxu0 %v107
    %v551 = vpop.f32.mrb[0].mxu0
    %v552 = vadd.f32 %v217, %v551
    %v553 = vpop.f32.mrb[0].mxu0
    %v554 = vpop.f32.mrb[0].mxu0
    %v555 = vpop.f32.mrb[0].mxu0
    %556 = vdwg.mxu0
    %557 = vmatprep.subr.bf16.mxu0 0
    %558 = vmatpush1.bf16.msra.mxu0 %v431
    %559 = vmatprep.subr.bf16.mxu0 0
    %560 = vmatpush1.bf16.msra.mxu0 %v432
    %561 = vmatprep.subr.bf16.mxu0 0
    %562 = vmatpush1.bf16.msra.mxu0 %v433
    %563 = vmatprep.subr.bf16.mxu0 0
    %564 = vmatpush1.bf16.msra.mxu0 %v434
    %565 = vmatprep.subr.bf16.mxu0 0
    %566 = vmatpush1.bf16.msra.mxu0 %v435
    %567 = vmatprep.subr.bf16.mxu0 0
    %568 = vmatpush1.bf16.msra.mxu0 %v436
    %569 = vmatprep.subr.bf16.mxu0 0
    %570 = vmatpush1.bf16.msra.mxu0 %v437
    %571 = vmatprep.subr.bf16.mxu0 0
    %572 = vmatpush1.bf16.msra.mxu0 %v438
    %573 = vmatprep.subr.bf16.mxu0 0
    %574 = vmatpush1.bf16.msra.mxu0 %v439
    %575 = vmatprep.subr.bf16.mxu0 0
    %576 = vmatpush1.bf16.msra.mxu0 %v440
    %577 = vmatprep.subr.bf16.mxu0 0
    %578 = vmatpush1.bf16.msra.mxu0 %v441
    %579 = vmatprep.subr.bf16.mxu0 0
    %580 = vmatpush1.bf16.msra.mxu0 %v442
    %581 = vmatprep.subr.bf16.mxu0 0
    %582 = vmatpush1.bf16.msra.mxu0 %v443
    %583 = vmatprep.subr.bf16.mxu0 0
    %584 = vmatpush1.bf16.msra.mxu0 %v444
    %585 = vmatprep.subr.bf16.mxu0 0
    %586 = vmatpush1.bf16.msra.mxu0 %v445
    %587 = vmatprep.subr.bf16.mxu0 0
    %588 = vmatpush1.bf16.msra.mxu0 %v446
    %589 = vmatprep.mubr.bf16.mxu0 %v110
    %590 = vmatmul.mubr.bf16.gmra.mrb[0].mxu0 %v109
    %v591 = vpop.f32.mrb[0].mxu0
    %v592 = vadd.f32 %v552, %v591
    %v593 = vpop.f32.mrb[0].mxu0
    %v594 = vpop.f32.mrb[0].mxu0
    %v595 = vpop.f32.mrb[0].mxu0
    %596 = vdwg.mxu0
    %597 = vmatprep.subr.bf16.mxu0 0
    %598 = vmatpush1.bf16.msra.mxu0 %v447
    %599 = vmatprep.subr.bf16.mxu0 0
    %600 = vmatpush1.bf16.msra.mxu0 %v448
    %601 = vmatprep.subr.bf16.mxu0 0
    %602 = vmatpush1.bf16.msra.mxu0 %v449
    %603 = vmatprep.subr.bf16.mxu0 0
    %604 = vmatpush1.bf16.msra.mxu0 %v450
    %605 = vmatprep.subr.bf16.mxu0 0
    %606 = vmatpush1.bf16.msra.mxu0 %v451
    %607 = vmatprep.subr.bf16.mxu0 0
    %608 = vmatpush1.bf16.msra.mxu0 %v452
    %609 = vmatprep.subr.bf16.mxu0 0
    %610 = vmatpush1.bf16.msra.mxu0 %v453
    %611 = vmatprep.subr.bf16.mxu0 0
    %612 = vmatpush1.bf16.msra.mxu0 %v454
    %613 = vmatprep.subr.bf16.mxu0 0
    %614 = vmatpush1.bf16.msra.mxu0 %v455
    %615 = vmatprep.subr.bf16.mxu0 0
    %616 = vmatpush1.bf16.msra.mxu0 %v456
    %617 = vmatprep.subr.bf16.mxu0 0
    %618 = vmatpush1.bf16.msra.mxu0 %v457
    %619 = vmatprep.subr.bf16.mxu0 0
    %620 = vmatpush1.bf16.msra.mxu0 %v458
    %621 = vmatprep.subr.bf16.mxu0 0
    %622 = vmatpush1.bf16.msra.mxu0 %v459
    %623 = vmatprep.subr.bf16.mxu0 0
    %624 = vmatpush1.bf16.msra.mxu0 %v460
    %625 = vmatprep.subr.bf16.mxu0 0
    %626 = vmatpush1.bf16.msra.mxu0 %v461
    %627 = vmatprep.subr.bf16.mxu0 0
    %628 = vmatpush1.bf16.msra.mxu0 %v462
    %629 = vmatprep.mubr.bf16.mxu0 %v112
    %630 = vmatmul.mubr.bf16.gmra.mrb[0].mxu0 %v111
    %v631 = vpop.f32.mrb[0].mxu0
    %v632 = vadd.f32 %v592, %v631
    %v633 = vpop.f32.mrb[0].mxu0
    %v634 = vpop.f32.mrb[0].mxu0
    %v635 = vpop.f32.mrb[0].mxu0
    %636 = vdwg.mxu0
    %637 = vmatprep.subr.bf16.mxu0 0
    %638 = vmatpush1.bf16.msra.mxu0 %v463
    %639 = vmatprep.subr.bf16.mxu0 0
    %640 = vmatpush1.bf16.msra.mxu0 0
    %641 = vmatprep.subr.bf16.mxu0 0
    %642 = vmatpush1.bf16.msra.mxu0 0
    %643 = vmatprep.subr.bf16.mxu0 0
    %644 = vmatpush1.bf16.msra.mxu0 0
    %645 = vmatprep.subr.bf16.mxu0 0
    %646 = vmatpush1.bf16.msra.mxu0 0
    %647 = vmatprep.subr.bf16.mxu0 0
    %648 = vmatpush1.bf16.msra.mxu0 0
    %649 = vmatprep.subr.bf16.mxu0 0
    %650 = vmatpush1.bf16.msra.mxu0 0
    %651 = vmatprep.subr.bf16.mxu0 0
    %652 = vmatpush1.bf16.msra.mxu0 0
    %653 = vmatprep.subr.bf16.mxu0 0
    %654 = vmatpush1.bf16.msra.mxu0 0
    %655 = vmatprep.subr.bf16.mxu0 0
    %656 = vmatpush1.bf16.msra.mxu0 0
    %657 = vmatprep.subr.bf16.mxu0 0
    %658 = vmatpush1.bf16.msra.mxu0 0
    %659 = vmatprep.subr.bf16.mxu0 0
    %660 = vmatpush1.bf16.msra.mxu0 0
    %661 = vmatprep.subr.bf16.mxu0 0
    %662 = vmatpush1.bf16.msra.mxu0 0
    %663 = vmatprep.subr.bf16.mxu0 0
    %664 = vmatpush1.bf16.msra.mxu0 0
    %665 = vmatprep.subr.bf16.mxu0 0
    %666 = vmatpush1.bf16.msra.mxu0 0
    %667 = vmatprep.subr.bf16.mxu0 0
    %668 = vmatpush1.bf16.msra.mxu0 0
    %669 = vmatprep.mubr.bf16.mxu0 0
    %670 = vmatmul.mubr.bf16.gmra.mrb[0].mxu0 %v515
    %v671 = vpop.f32.mrb[0].mxu0
    %v672 = vadd.f32 %v632, %v671
    %v673 = vpop.f32.mrb[0].mxu0
    %v674 = vpop.f32.mrb[0].mxu0
    %v675 = vpop.f32.mrb[0].mxu0
    %676 = vdwg.mxu0
    %v677 = vmax.f32 %v672, 0.0
    %v678 = vpack.c.bf16 %v677, %v677
    %v679 = vld [vmem:[#allocation7] sm:$0xf]
    %v680 = vld [vmem:[#allocation7 + $0x4] sm:$0xf]
    %v681 = vld [vmem:[#allocation7 + $0x8] sm:$0xf]
    %v682 = vld [vmem:[#allocation7 + $0xc] sm:$0xf]
    %v683 = vld [vmem:[#allocation7 + $0x10] sm:$0xf]
    %v684 = vld [vmem:[#allocation7 + $0x14] sm:$0xf]
    %v685 = vld [vmem:[#allocation7 + $0x18] sm:$0xf]
    %v686 = vld [vmem:[#allocation7 + $0x1c] sm:$0xf]
    %v687 = vld [vmem:[#allocation7 + $0x20] sm:$0xf]
    %v688 = vld [vmem:[#allocation7 + $0x24] sm:$0xf]
    %v689 = vld [vmem:[#allocation7 + $0x28] sm:$0xf]
    %v690 = vld [vmem:[#allocation7 + $0x2c] sm:$0xf]
    %v691 = vld [vmem:[#allocation7 + $0x30] sm:$0xf]
    %v692 = vld [vmem:[#allocation7 + $0x34] sm:$0xf]
    %v693 = vld [vmem:[#allocation7 + $0x38] sm:$0xf]
    %v694 = vld [vmem:[#allocation7 + $0x3c] sm:$0xf]
    %v695 = vld [vmem:[%s4] sm:$0x1]
    %v697 = vlaneseq
    %v698 = vshrl.u32 %v697, 7
    %v699 = vsub.s32 0, %v698
    %v700 = vrot.slane %v695, %v699
    %v718 = vunpack.c.l.b16 %v679
    %v719 = vunpack.c.l.b16 %v680
    %v720 = vunpack.c.l.b16 %v681
    %v721 = vunpack.c.l.b16 %v682
    %v722 = vunpack.c.l.b16 %v683
    %v723 = vunpack.c.l.b16 %v684
    %v724 = vunpack.c.l.b16 %v685
    %v725 = vunpack.c.l.b16 %v686
    %v726 = vunpack.c.l.b16 %v687
    %v727 = vunpack.c.l.b16 %v688
    %v728 = vunpack.c.l.b16 %v689
    %v729 = vunpack.c.l.b16 %v690
    %v730 = vunpack.c.l.b16 %v691
    %v731 = vunpack.c.l.b16 %v692
    %v732 = vunpack.c.l.b16 %v693
    %v733 = vunpack.c.l.b16 %v694
    %v734 = vpack.c.b16 %v719, %v718
    %v735 = vpack.c.b16 %v721, %v720
    %v736 = vpack.c.b16 %v723, %v722
    %v737 = vpack.c.b16 %v725, %v724
    %v738 = vpack.c.b16 %v727, %v726
    %v739 = vpack.c.b16 %v729, %v728
    %v740 = vpack.c.b16 %v731, %v730
    %v741 = vpack.c.b16 %v733, %v732
    %750 = vmatprep.subr.bf16.mxu0 0
    %751 = vmatpush1.bf16.msra.mxu0 %v734
    %752 = vmatprep.subr.bf16.mxu0 0
    %753 = vmatpush1.bf16.msra.mxu0 %v735
    %754 = vmatprep.subr.bf16.mxu0 0
    %755 = vmatpush1.bf16.msra.mxu0 %v736
    %756 = vmatprep.subr.bf16.mxu0 0
    %757 = vmatpush1.bf16.msra.mxu0 %v737
    %758 = vmatprep.subr.bf16.mxu0 0
    %759 = vmatpush1.bf16.msra.mxu0 %v738
    %760 = vmatprep.subr.bf16.mxu0 0
    %761 = vmatpush1.bf16.msra.mxu0 %v739
    %762 = vmatprep.subr.bf16.mxu0 0
    %763 = vmatpush1.bf16.msra.mxu0 %v740
    %764 = vmatprep.subr.bf16.mxu0 0
    %765 = vmatpush1.bf16.msra.mxu0 %v741
    %766 = vmatprep.subr.bf16.mxu0 0
    %767 = vmatpush1.bf16.msra.mxu0 0
    %768 = vmatprep.subr.bf16.mxu0 0
    %769 = vmatpush1.bf16.msra.mxu0 0
    %770 = vmatprep.subr.bf16.mxu0 0
    %771 = vmatpush1.bf16.msra.mxu0 0
    %772 = vmatprep.subr.bf16.mxu0 0
    %773 = vmatpush1.bf16.msra.mxu0 0
    %774 = vmatprep.subr.bf16.mxu0 0
    %775 = vmatpush1.bf16.msra.mxu0 0
    %776 = vmatprep.subr.bf16.mxu0 0
    %777 = vmatpush1.bf16.msra.mxu0 0
    %778 = vmatprep.subr.bf16.mxu0 0
    %779 = vmatpush1.bf16.msra.mxu0 0
    %780 = vmatprep.subr.bf16.mxu0 0
    %781 = vmatpush1.bf16.msra.mxu0 0
    %782 = vmatprep.mubr.bf16.mxu0 0
    %783 = vmatmul.mubr.bf16.gmra.mrb[0].mxu0 %v678
    %v784 = vpop.f32.mrb[0].mxu0
    %v785 = vadd.f32 %v700, %v784
    %v786 = vpop.f32.mrb[0].mxu0
    %v787 = vpop.f32.mrb[0].mxu0
    %v788 = vpop.f32.mrb[0].mxu0
    %789 = vdwg.mxu0
    %v790 = vmax.f32 %v785, 0.0
    %v791 = vpack.c.bf16 %v790, %v790
    %v792 = vld [vmem:[#allocation8] sm:$0xf]
    %v793 = vld [vmem:[#allocation8 + $0x4] sm:$0xf]
    %v794 = vld [vmem:[#allocation8 + $0x8] sm:$0xf]
    %v795 = vld [vmem:[#allocation8 + $0xc] sm:$0xf]
    %v796 = vld [vmem:[#allocation8 + $0x10] sm:$0xf]
    %v797 = vld [vmem:[#allocation8 + $0x14] sm:$0xf]
    %v798 = vld [vmem:[#allocation8 + $0x18] sm:$0xf]
    %v799 = vld [vmem:[#allocation8 + $0x1c] sm:$0xf]
    %v800 = vld [vmem:[#allocation8 + $0x20] sm:$0xf]
    %v801 = vld [vmem:[#allocation8 + $0x24] sm:$0xf]
    %v802 = vld [vmem:[#allocation8 + $0x28] sm:$0xf]
    %v803 = vld [vmem:[#allocation8 + $0x2c] sm:$0xf]
    %v804 = vld [vmem:[#allocation8 + $0x30] sm:$0xf]
    %v805 = vld [vmem:[#allocation8 + $0x34] sm:$0xf]
    %v806 = vld [vmem:[#allocation8 + $0x38] sm:$0xf]
    %v807 = vld [vmem:[#allocation8 + $0x3c] sm:$0xf]
    %v808 = vld [vmem:[%s6] sm:$0x1]
    %v810 = vlaneseq
    %v811 = vshrl.u32 %v810, 7
    %v812 = vsub.s32 0, %v811
    %v813 = vrot.slane %v808, %v812
    %v831 = vunpack.c.l.b16 %v792
    %v832 = vunpack.c.l.b16 %v793
    %v833 = vunpack.c.l.b16 %v794
    %v834 = vunpack.c.l.b16 %v795
    %v835 = vunpack.c.l.b16 %v796
    %v836 = vunpack.c.l.b16 %v797
    %v837 = vunpack.c.l.b16 %v798
    %v838 = vunpack.c.l.b16 %v799
    %v839 = vunpack.c.l.b16 %v800
    %v840 = vunpack.c.l.b16 %v801
    %v841 = vunpack.c.l.b16 %v802
    %v842 = vunpack.c.l.b16 %v803
    %v843 = vunpack.c.l.b16 %v804
    %v844 = vunpack.c.l.b16 %v805
    %v845 = vunpack.c.l.b16 %v806
    %v846 = vunpack.c.l.b16 %v807
    %v847 = vpack.c.b16 %v832, %v831
    %v848 = vpack.c.b16 %v834, %v833
    %v849 = vpack.c.b16 %v836, %v835
    %v850 = vpack.c.b16 %v838, %v837
    %v851 = vpack.c.b16 %v840, %v839
    %v852 = vpack.c.b16 %v842, %v841
    %v853 = vpack.c.b16 %v844, %v843
    %v854 = vpack.c.b16 %v846, %v845
    %863 = vmatprep.subr.bf16.mxu0 0
    %864 = vmatpush1.bf16.msra.mxu0 %v847
    %865 = vmatprep.subr.bf16.mxu0 0
    %866 = vmatpush1.bf16.msra.mxu0 %v848
    %867 = vmatprep.subr.bf16.mxu0 0
    %868 = vmatpush1.bf16.msra.mxu0 %v849
    %869 = vmatprep.subr.bf16.mxu0 0
    %870 = vmatpush1.bf16.msra.mxu0 %v850
    %871 = vmatprep.subr.bf16.mxu0 0
    %872 = vmatpush1.bf16.msra.mxu0 %v851
    %873 = vmatprep.subr.bf16.mxu0 0
    %874 = vmatpush1.bf16.msra.mxu0 %v852
    %875 = vmatprep.subr.bf16.mxu0 0
    %876 = vmatpush1.bf16.msra.mxu0 %v853
    %877 = vmatprep.subr.bf16.mxu0 0
    %878 = vmatpush1.bf16.msra.mxu0 %v854
    %879 = vmatprep.subr.bf16.mxu0 0
    %880 = vmatpush1.bf16.msra.mxu0 0
    %881 = vmatprep.subr.bf16.mxu0 0
    %882 = vmatpush1.bf16.msra.mxu0 0
    %883 = vmatprep.subr.bf16.mxu0 0
    %884 = vmatpush1.bf16.msra.mxu0 0
    %885 = vmatprep.subr.bf16.mxu0 0
    %886 = vmatpush1.bf16.msra.mxu0 0
    %887 = vmatprep.subr.bf16.mxu0 0
    %888 = vmatpush1.bf16.msra.mxu0 0
    %889 = vmatprep.subr.bf16.mxu0 0
    %890 = vmatpush1.bf16.msra.mxu0 0
    %891 = vmatprep.subr.bf16.mxu0 0
    %892 = vmatpush1.bf16.msra.mxu0 0
    %893 = vmatprep.subr.bf16.mxu0 0
    %894 = vmatpush1.bf16.msra.mxu0 0
    %895 = vmatprep.mubr.bf16.mxu0 0
    %896 = vmatmul.mubr.bf16.gmra.mrb[0].mxu0 %v791
    %v897 = vpop.f32.mrb[0].mxu0
    %v898 = vadd.f32 %v813, %v897
    %v899 = vpop.f32.mrb[0].mxu0
    %v900 = vpop.f32.mrb[0].mxu0
    %v901 = vpop.f32.mrb[0].mxu0
    %902 = vdwg.mxu0
    %v903 = vmax.f32 %v898, 0.0
    %v904 = vpack.c.bf16 %v903, %v903
    %v905 = vld [vmem:[#allocation10] sm:$0xf]
    %v906 = vld [vmem:[#allocation10 + $0x4] sm:$0xf]
    %v907 = vld [vmem:[#allocation10 + $0x8] sm:$0xf]
    %v908 = vld [vmem:[#allocation10 + $0xc] sm:$0xf]
    %v909 = vld [vmem:[#allocation10 + $0x10] sm:$0xf]
    %v910 = vld [vmem:[#allocation10 + $0x14] sm:$0xf]
    %v911 = vld [vmem:[#allocation10 + $0x18] sm:$0xf]
    %v912 = vld [vmem:[#allocation10 + $0x1c] sm:$0xf]
    %v913 = vld [vmem:[#allocation10 + $0x20] sm:$0xf]
    %v914 = vld [vmem:[#allocation10 + $0x24] sm:$0xf]
    %v915 = vld [vmem:[#allocation10 + $0x28] sm:$0xf]
    %v916 = vld [vmem:[#allocation10 + $0x2c] sm:$0xf]
    %v917 = vld [vmem:[#allocation10 + $0x30] sm:$0xf]
    %v918 = vld [vmem:[#allocation10 + $0x34] sm:$0xf]
    %v919 = vld [vmem:[#allocation10 + $0x38] sm:$0xf]
    %v920 = vld [vmem:[#allocation10 + $0x3c] sm:$0xf]
    %v921 = vld [vmem:[%s8] sm:$0x1]
    %v923 = vlaneseq
    %v924 = vshrl.u32 %v923, 7
    %v925 = vsub.s32 0, %v924
    %v926 = vrot.slane %v921, %v925
    %v944 = vunpack.c.l.b16 %v905
    %v945 = vunpack.c.l.b16 %v906
    %v946 = vunpack.c.l.b16 %v907
    %v947 = vunpack.c.l.b16 %v908
    %v948 = vunpack.c.l.b16 %v909
    %v949 = vunpack.c.l.b16 %v910
    %v950 = vunpack.c.l.b16 %v911
    %v951 = vunpack.c.l.b16 %v912
    %v952 = vunpack.c.l.b16 %v913
    %v953 = vunpack.c.l.b16 %v914
    %v954 = vunpack.c.l.b16 %v915
    %v955 = vunpack.c.l.b16 %v916
    %v956 = vunpack.c.l.b16 %v917
    %v957 = vunpack.c.l.b16 %v918
    %v958 = vunpack.c.l.b16 %v919
    %v959 = vunpack.c.l.b16 %v920
    %v960 = vpack.c.b16 %v945, %v944
    %v961 = vpack.c.b16 %v947, %v946
    %v962 = vpack.c.b16 %v949, %v948
    %v963 = vpack.c.b16 %v951, %v950
    %v964 = vpack.c.b16 %v953, %v952
    %v965 = vpack.c.b16 %v955, %v954
    %v966 = vpack.c.b16 %v957, %v956
    %v967 = vpack.c.b16 %v959, %v958
    %976 = vmatprep.subr.bf16.mxu0 0
    %977 = vmatpush1.bf16.msra.mxu0 %v960
    %978 = vmatprep.subr.bf16.mxu0 0
    %979 = vmatpush1.bf16.msra.mxu0 %v961
    %980 = vmatprep.subr.bf16.mxu0 0
    %981 = vmatpush1.bf16.msra.mxu0 %v962
    %982 = vmatprep.subr.bf16.mxu0 0
    %983 = vmatpush1.bf16.msra.mxu0 %v963
    %984 = vmatprep.subr.bf16.mxu0 0
    %985 = vmatpush1.bf16.msra.mxu0 %v964
    %986 = vmatprep.subr.bf16.mxu0 0
    %987 = vmatpush1.bf16.msra.mxu0 %v965
    %988 = vmatprep.subr.bf16.mxu0 0
    %989 = vmatpush1.bf16.msra.mxu0 %v966
    %990 = vmatprep.subr.bf16.mxu0 0
    %991 = vmatpush1.bf16.msra.mxu0 %v967
    %992 = vmatprep.subr.bf16.mxu0 0
    %993 = vmatpush1.bf16.msra.mxu0 0
    %994 = vmatprep.subr.bf16.mxu0 0
    %995 = vmatpush1.bf16.msra.mxu0 0
    %996 = vmatprep.subr.bf16.mxu0 0
    %997 = vmatpush1.bf16.msra.mxu0 0
    %998 = vmatprep.subr.bf16.mxu0 0
    %999 = vmatpush1.bf16.msra.mxu0 0
    %1000 = vmatprep.subr.bf16.mxu0 0
    %1001 = vmatpush1.bf16.msra.mxu0 0
    %1002 = vmatprep.subr.bf16.mxu0 0
    %1003 = vmatpush1.bf16.msra.mxu0 0
    %1004 = vmatprep.subr.bf16.mxu0 0
    %1005 = vmatpush1.bf16.msra.mxu0 0
    %1006 = vmatprep.subr.bf16.mxu0 0
    %1007 = vmatpush1.bf16.msra.mxu0 0
    %1008 = vmatprep.mubr.bf16.mxu0 0
    %1009 = vmatmul.mubr.bf16.gmra.mrb[0].mxu0 %v904
    %v1010 = vpop.f32.mrb[0].mxu0
    %v1011 = vadd.f32 %v926, %v1010
    %v1012 = vpop.f32.mrb[0].mxu0
    %v1013 = vpop.f32.mrb[0].mxu0
    %v1014 = vpop.f32.mrb[0].mxu0
    %1015 = vdwg.mxu0
    %1016 = vst [vmem:[#allocation11] sm:$0xff] %v1011
    // Predicated region
    $region58: #{tpu_custom_call.1} parent=1 // pred_check
      _
    $region59: #{tpu_custom_call.1} parent=1 // pred_check_branch
      %1018 = sbr.rel (0) target = $region61
    $region60: #{tpu_custom_call.1} parent=1 // pred_region
      %s1020 = ssub.s32 128, 128
      %1021 = vsyncadd [#allocation4], %s1020
      %s1023 = sshll.u32 [#allocation11], 4
      %s1024 = int_to_ptr.vmem [resolvable:$true] %s1023
      %1026 = dma.vmem_to_hbm [thread:$0]  %s1024, 128, %s9, [#allocation4]
    $region61: #{tpu_custom_call.1} parent=1 // pred_fallthru
      _
    // Predicated region
    $region62: #{tpu_custom_call.1} parent=1 // pred_check
      _
    $region63: #{tpu_custom_call.1} parent=1 // pred_check_branch
      %1028 = sbr.rel (0) target = $region65
    $region64: #{tpu_custom_call.1} parent=1 // pred_region
      %1029 = dma.done [#allocation4], 128
    $region65: #{tpu_custom_call.1} parent=1 // pred_fallthru
      _
    %1030 = vsyncpa [#allocation3], 1
    %1031 = vsyncpa [#allocation6], 1
    %1032 = vsyncpa [#allocation9], 1
    %1033 = vsyncpa [#allocation4], 1

</llo_original>
